<compile_context>
chip_gen: v6e
topology: v6e:2x2x1
jax: 0.10.0
libtpu: 0.0.40
codegen_flags: <defaults>
</compile_context>

<pallas_src>
import functools

import jax
import jax.numpy as jnp
from jax.experimental import pallas as pl
from jax.experimental.pallas import tpu as pltpu

_LANES = 128
_SUBLANES = 8
_EPS = 1e-8
_MAX_CHUNK_ROWS = 64  # 64x128 f32 = 8 vregs per operand per fori_loop step


def _sublane_align(dtype) -> int:
    # Minimum sublane multiple for a non-full BlockSpec tile:
    # 8 for 4-byte dtypes, 16 for 2-byte, 32 for 1-byte.
    itemsize = jnp.dtype(dtype).itemsize
    return _SUBLANES * max(1, 4 // itemsize)


def _pick_tiling(rows, block_rows, align):
    """Pick (tile_rows, ragged). Prefers tiles that divide `rows` exactly."""
    cap = min(block_rows, rows)
    cap = (cap // align) * align
    if rows >= 2 * align:
        # Keep >= 2 grid steps so v7x's second TensorCore gets work.
        cap = min(cap, (rows // 2) // align * align)
    cap = max(cap, align)
    for tr in range(cap, align - 1, -align):
        if rows % tr == 0:
            if 4 * tr >= cap:          # good-enough divisor: no in-kernel mask
                return tr, False
            break
    return cap, True                   # ragged last tile: mask it in-kernel


def _pick_chunk_rows(tile_rows, align):
    cap = min(tile_rows, max(_MAX_CHUNK_ROWS, align))
    cap = (cap // align) * align
    for c in range(cap, align - 1, -align):
        if tile_rows % c == 0:
            return c
    return align


def _dice_kernel(x_ref, t_ref, out_ref, *, rows, tile_rows, chunk_rows, ragged):
    """Per-tile partial sums of x*t and x*x + t*t, packed into (2, 8, 128)."""
    n_chunks = tile_rows // chunk_rows
    groups = chunk_rows // _SUBLANES
    tile_row0 = pl.program_id(0) * tile_rows

    def body(c, carry):
        num_acc, den_acc = carry
        r0 = pl.multiple_of(c * chunk_rows, chunk_rows)
        x = x_ref[pl.ds(r0, chunk_rows), :].astype(jnp.float32)
        t = t_ref[pl.ds(r0, chunk_rows), :].astype(jnp.float32)
        prod = x * t
        sq = x * x + t * t
        if ragged:
            # Rare path (only compiled when no dividing tile exists): the last
            # tile overhangs the slab, so rows >= `rows` hold undefined VMEM.
            # Use select (not multiply) so NaN/Inf garbage is killed.
            ridx = (jax.lax.broadcasted_iota(jnp.int32, (chunk_rows, _LANES), 0)
                    + tile_row0 + r0)
            valid = ridx < rows
            prod = jnp.where(valid, prod, 0.0)
            sq = jnp.where(valid, sq, 0.0)
        num_acc = num_acc + jnp.sum(prod.reshape(groups, _SUBLANES, _LANES), axis=0)
        den_acc = den_acc + jnp.sum(sq.reshape(groups, _SUBLANES, _LANES), axis=0)
        return num_acc, den_acc

    zero = jnp.zeros((_SUBLANES, _LANES), jnp.float32)
    num_acc, den_acc = jax.lax.fori_loop(
        0, n_chunks, body, (zero, zero), unroll=2 if n_chunks > 1 else 1)
    out_ref[0, 0, :, :] = num_acc
    out_ref[0, 1, :, :] = den_acc


@functools.partial(jax.jit, static_argnames=("block_rows",))
def dice_loss(x, t, *, block_rows=8192):
    assert x.shape == t.shape, "input and target must have the same shape"
    assert block_rows >= _SUBLANES

    # No useful f64 vector path on TPU; fold wide dtypes to f32 up front.
    if jnp.dtype(x.dtype).itemsize > 4:
        x = x.astype(jnp.float32)
    if jnp.dtype(t.dtype).itemsize > 4:
        t = t.astype(jnp.float32)

    n = x.size
    xf = x.reshape(-1)
    tf = t.reshape(-1)

    align = max(_sublane_align(x.dtype), _sublane_align(t.dtype))
    n_aligned = (n // (align * _LANES)) * (align * _LANES)

    num = jnp.float32(0.0)
    den = jnp.float32(0.0)

    if n_aligned > 0:
        rows = n_aligned // _LANES
        x2 = xf[:n_aligned].reshape(rows, _LANES)   # layout-trivial in common case
        t2 = tf[:n_aligned].reshape(rows, _LANES)

        tile_rows, ragged = _pick_tiling(rows, block_rows, align)
        chunk_rows = _pick_chunk_rows(tile_rows, align)
        grid = (pl.cdiv(rows, tile_rows),)

        kernel = functools.partial(
            _dice_kernel,
            rows=rows, tile_rows=tile_rows, chunk_rows=chunk_rows, ragged=ragged,
        )

        # Double-buffered input tiles dominate VMEM; derive the limit from the
        # actual need (fits v7x's 64 MiB at the default tile, allows bigger
        # user-requested tiles on v5e/v6e's 128 MiB).
        in_bytes = x.dtype.itemsize + t.dtype.itemsize
        buf_bytes = 2 * tile_rows * _LANES * in_bytes
        vmem_limit = int(min(max(buf_bytes + (4 << 20), 32 << 20), 100 << 20))

        out_bytes = grid[0] * 2 * _SUBLANES * _LANES * 4
        cost = pl.CostEstimate(
            flops=6 * n_aligned,
            transcendentals=0,
            bytes_accessed=n_aligned * in_bytes + out_bytes,
        )

        partials = pl.pallas_call(
            kernel,
            out_shape=jax.ShapeDtypeStruct(
                (grid[0], 2, _SUBLANES, _LANES), jnp.float32),
            grid_spec=pltpu.PrefetchScalarGridSpec(
                num_scalar_prefetch=0,
                grid=grid,
                in_specs=[
                    pl.BlockSpec((tile_rows, _LANES), lambda i: (i, 0)),
                    pl.BlockSpec((tile_rows, _LANES), lambda i: (i, 0)),
                ],
                out_specs=pl.BlockSpec(
                    (1, 2, _SUBLANES, _LANES), lambda i: (i, 0, 0, 0)),
            ),
            compiler_params=pltpu.CompilerParams(
                dimension_semantics=("parallel",),
                vmem_limit_bytes=vmem_limit,
            ),
            cost_estimate=cost,
        )(x2, t2)

        num = num + jnp.sum(partials[:, 0])
        den = den + jnp.sum(partials[:, 1])

    if n_aligned < n:
        # Sub-vreg tail (< align*128 elements): plain jnp, avoiding a whole-array
        # jnp.pad copy on the misaligned path.
        xt = xf[n_aligned:].astype(jnp.float32)
        tt = tf[n_aligned:].astype(jnp.float32)
        num = num + jnp.sum(xt * tt)
        den = den + jnp.sum(xt * xt + tt * tt)

    return 1.0 - 2.0 * num / (den + jnp.float32(_EPS))


def dice_loss_ref(x, t):
    x = x.astype(jnp.float32)
    t = t.astype(jnp.float32)
    return 1.0 - 2.0 * jnp.sum(x * t) / (jnp.sum(x * x + t * t) + _EPS)


if __name__ == "__main__":
    key = jax.random.PRNGKey(0)
    k1, k2, k3, k4 = jax.random.split(key, 4)

    # Primary: (B, 1, H, W) probability maps; aligned, multi-tile grid.
    x = jax.nn.sigmoid(jax.random.normal(k1, (2, 1, 32, 32), dtype=jnp.float32))
    t = (jax.random.uniform(k2, (2, 1, 32, 32)) > 0.5).astype(jnp.float32)
    loss = dice_loss(x, t)
    jax.block_until_ready(loss)
    assert jnp.allclose(loss, dice_loss_ref(x, t), rtol=1e-5, atol=1e-6), loss

    # Ragged last tile (rows % tile_rows != 0) -> exercises the in-kernel mask.
    xr = jax.nn.sigmoid(jax.random.normal(k3, (1, 1, 104, 128), dtype=jnp.float32))
    tr = (jax.random.uniform(k4, (1, 1, 104, 128)) > 0.5).astype(jnp.float32)
    loss_r = dice_loss(xr, tr, block_rows=48)
    jax.block_until_ready(loss_r)
    assert jnp.allclose(loss_r, dice_loss_ref(xr, tr), rtol=1e-5, atol=1e-6), loss_r

    # Misaligned element count (jnp tail) + bf16 inputs (in-kernel cast).
    xb = jax.nn.sigmoid(jax.random.normal(k1, (3, 1, 29, 31), dtype=jnp.bfloat16))
    tb = (jax.random.uniform(k2, (3, 1, 29, 31)) > 0.5).astype(jnp.bfloat16)
    loss_b = dice_loss(xb, tb)
    jax.block_until_ready(loss_b)
    assert jnp.allclose(loss_b, dice_loss_ref(xb, tb), rtol=1e-4, atol=1e-5), loss_b

    # Tiny input (< one aligned vreg group) -> pure-jnp fallback path.
    xs = jax.nn.sigmoid(jax.random.normal(k3, (2, 1, 16, 16), dtype=jnp.float32))
    ts = (jax.random.uniform(k4, (2, 1, 16, 16)) > 0.5).astype(jnp.float32)
    assert jnp.allclose(dice_loss(xs, ts), dice_loss_ref(xs, ts), rtol=1e-5, atol=1e-6)

    print("KERNEL_OK")
</pallas_src>

<mosaic_0001>
module attributes {stable_mosaic.version = 11 : i64} {
  func.func @_dice_kernel(%arg0: i32, %arg1: memref<8x128xf32, #tpu.memory_space<vmem>>, %arg2: memref<8x128xf32, #tpu.memory_space<vmem>>, %arg3: memref<1x2x8x128xf32, #tpu.memory_space<vmem>>) attributes {dimension_semantics = [#tpu.dimension_semantics<parallel>], iteration_bounds = array<i64: 2>, scalar_prefetch = 0 : i64, scratch_operands = 0 : i64, tpu.core_type = #tpu.core_type<tc>, window_params = [{transform_indices = @transform_0, window_bounds = array<i64: 8, 128>}, {transform_indices = @transform_1, window_bounds = array<i64: 8, 128>}, {transform_indices = @transform_2, window_bounds = array<i64: 1, 2, 8, 128>}]} {
    %cst = arith.constant 0.000000e+00 : f32
    %0 = vector.broadcast %cst : f32 to vector<8x128xf32>
    %c0_i32 = arith.constant 0 : i32
    %c8_i32 = arith.constant 8 : i32
    %1 = arith.muli %c0_i32, %c8_i32 : i32
    %2 = tpu.assume_multiple %1, 8 : i32
    %3 = arith.index_cast %2 : i32 to index
    %c0 = arith.constant 0 : index
    %4 = vector.load %arg1[%3, %c0] : memref<8x128xf32, #tpu.memory_space<vmem>>, vector<8x128xf32>
    %5 = arith.index_cast %2 : i32 to index
    %c0_0 = arith.constant 0 : index
    %6 = vector.load %arg2[%5, %c0_0] : memref<8x128xf32, #tpu.memory_space<vmem>>, vector<8x128xf32>
    %7 = arith.mulf %4, %6 : vector<8x128xf32>
    %8 = arith.mulf %4, %4 : vector<8x128xf32>
    %9 = arith.mulf %6, %6 : vector<8x128xf32>
    %10 = arith.addf %8, %9 : vector<8x128xf32>
    %11 = vector.shape_cast %7 : vector<8x128xf32> to vector<1x8x128xf32>
    %cst_1 = arith.constant dense<0.000000e+00> : vector<8x128xf32>
    %12 = vector.multi_reduction <add>, %11, %cst_1 [0] : vector<1x8x128xf32> to vector<8x128xf32>
    %13 = arith.addf %0, %12 : vector<8x128xf32>
    %14 = vector.shape_cast %10 : vector<8x128xf32> to vector<1x8x128xf32>
    %cst_2 = arith.constant dense<0.000000e+00> : vector<8x128xf32>
    %15 = vector.multi_reduction <add>, %14, %cst_2 [0] : vector<1x8x128xf32> to vector<8x128xf32>
    %16 = arith.addf %0, %15 : vector<8x128xf32>
    %c1_i32 = arith.constant 1 : i32
    %c0_3 = arith.constant 0 : index
    %c0_4 = arith.constant 0 : index
    %c0_5 = arith.constant 0 : index
    %c0_6 = arith.constant 0 : index
    %17 = vector.load %arg3[%c0_3, %c0_4, %c0_5, %c0_6] : memref<1x2x8x128xf32, #tpu.memory_space<vmem>>, vector<1x1x8x128xf32>
    %18 = vector.shape_cast %17 : vector<1x1x8x128xf32> to vector<8x128xf32>
    %19 = vector.shape_cast %13 : vector<8x128xf32> to vector<1x1x8x128xf32>
    tpu.vector_store %arg3[%c0_3, %c0_4, %c0_5, %c0_6], %19 {strides = array<i32>} : memref<1x2x8x128xf32, #tpu.memory_space<vmem>>, vector<1x1x8x128xf32>,
    %c0_7 = arith.constant 0 : index
    %c1 = arith.constant 1 : index
    %c0_8 = arith.constant 0 : index
    %c0_9 = arith.constant 0 : index
    %20 = vector.load %arg3[%c0_7, %c1, %c0_8, %c0_9] : memref<1x2x8x128xf32, #tpu.memory_space<vmem>>, vector<1x1x8x128xf32>
    %21 = vector.shape_cast %20 : vector<1x1x8x128xf32> to vector<8x128xf32>
    %22 = vector.shape_cast %16 : vector<8x128xf32> to vector<1x1x8x128xf32>
    tpu.vector_store %arg3[%c0_7, %c1, %c0_8, %c0_9], %22 {strides = array<i32>} : memref<1x2x8x128xf32, #tpu.memory_space<vmem>>, vector<1x1x8x128xf32>,
    return
  }
  func.func @transform_0(%arg0: i32) -> (i32, i32) {
    %c0_i32 = arith.constant 0 : i32
    %c0_i32_0 = arith.constant 0 : i32
    return %arg0, %c0_i32 : i32, i32
  }
  func.func @transform_1(%arg0: i32) -> (i32, i32) {
    %c0_i32 = arith.constant 0 : i32
    %c0_i32_0 = arith.constant 0 : i32
    return %arg0, %c0_i32 : i32, i32
  }
  func.func @transform_2(%arg0: i32) -> (i32, i32, i32, i32) {
    %c0_i32 = arith.constant 0 : i32
    %c0_i32_0 = arith.constant 0 : i32
    %c0_i32_1 = arith.constant 0 : i32
    %c0_i32_2 = arith.constant 0 : i32
    return %arg0, %c0_i32, %c0_i32_0, %c0_i32_1 : i32, i32, i32, i32
  }
}

</mosaic_0001>

<llo_original>
// kernel: dice_loss.1
$region0: #{dice_loss.1}
  #allocation0 [shape = 'u32[]', space=smem, size = 0x4, offset = 0x4, fixed_abs, tag = 'smem constant byte address 0x4 - core index']
  #allocation1 [shape = 'u32[144,128]{1,0:T(1,128)}', space=vmem, size = 0x12000, scoped, tag = 'internal scratch']
  %s0 = inlined_call_operand.vmem [shape: f32[16,128], index: 0, kind: input, shape index: {}]
  %s1 = inlined_call_operand.vmem [shape: f32[16,128], index: 1, kind: input, shape index: {}]
  %s2 = inlined_call_operand.vmem [shape: f32[2,2,8,128], index: 2, kind: output, shape index: {}]
  %s3 = sld [smem:[#allocation0]]
  $region41: #{dice_loss.1} parent=0
    _
  %s5 = ssub.s32 1, %s3
  %s6 = scalar_select 0, %s5, %s3
  loop: start=0, step=1, limit=4
  $region2: #{dice_loss.1} parent=0 // loop_pre_header
    _
  $region3: #{dice_loss.1} parent=0 // loop_header
    %s8 = sphi 0, %s12
    %p9 = scmp.ge.s32.totalorder %s8, 4
    %s18 = sphi 0, %s20
    %s21 = sphi 0, %s18
    %s22 = sphi 0, %s21
    %s38 = sphi 0, %s22
    %s44 = sphi 0, %s46
    %s47 = sphi 0, %s44
    %s48 = sphi 0, %s47
    %s64 = sphi 0, %s48
    %s70 = sphi 0, %s72
    %s73 = sphi 0, %s70
    %s74 = sphi 0, %s73
    %s90 = sphi 0, %s74
  $region4: #{dice_loss.1} parent=0 // loop_header_branch
    %11 = sbr.rel (%p9) target = $region8
  $region5: #{dice_loss.1} parent=0 // loop_body
    %s13 = ssub.s32 %s8, 1
    %s14 = ssub.s32 %s8, 2
    %s15 = sadd.s32 %s8, 1
    %s16 = ssub.s32 %s8, %s15
    %p17 = scmp.eq.s32.totalorder %s16, 0
    %s19 = sadd.s32 %s18, 1
    %s20 = scalar_select %p17, %s18, %s19
    %p23 = pneg %p17
    %p24 = scmp.eq.s32.totalorder %s8, 1
    %p25 = por %p23, %p24
    %p26 = scmp.ne.s32.totalorder %s18, %s21
    %p27 = scmp.eq.s32.totalorder %s8, 0
    %p28 = por %p26, %p27
    %p29 = scmp.ne.s32.totalorder %s18, %s21
    %p30 = scmp.eq.s32.totalorder %s13, 1
    %p31 = por %p29, %p30
    %p32 = scmp.ne.s32.totalorder %s21, %s22
    %p33 = scmp.eq.s32.totalorder %s13, 0
    %p34 = por %p32, %p33
    %p35 = scmp.ne.s32.totalorder %s21, %s22
    %p36 = scmp.eq.s32.totalorder %s14, 1
    %p37 = por %p35, %p36
    %p39 = scmp.ne.s32.totalorder %s22, %s38
    %p40 = scmp.eq.s32.totalorder %s14, 0
    %p41 = por %p39, %p40
    %s42 = ssub.s32 %s8, %s15
    %p43 = scmp.eq.s32.totalorder %s42, 0
    %s45 = sadd.s32 %s44, 1
    %s46 = scalar_select %p43, %s44, %s45
    %p49 = pneg %p43
    %p50 = scmp.eq.s32.totalorder %s8, 1
    %p51 = por %p49, %p50
    %p52 = scmp.ne.s32.totalorder %s44, %s47
    %p53 = scmp.eq.s32.totalorder %s8, 0
    %p54 = por %p52, %p53
    %p55 = scmp.ne.s32.totalorder %s44, %s47
    %p56 = scmp.eq.s32.totalorder %s13, 1
    %p57 = por %p55, %p56
    %p58 = scmp.ne.s32.totalorder %s47, %s48
    %p59 = scmp.eq.s32.totalorder %s13, 0
    %p60 = por %p58, %p59
    %p61 = scmp.ne.s32.totalorder %s47, %s48
    %p62 = scmp.eq.s32.totalorder %s14, 1
    %p63 = por %p61, %p62
    %p65 = scmp.ne.s32.totalorder %s48, %s64
    %p66 = scmp.eq.s32.totalorder %s14, 0
    %p67 = por %p65, %p66
    %s68 = ssub.s32 %s8, %s15
    %p69 = scmp.eq.s32.totalorder %s68, 0
    %s71 = sadd.s32 %s70, 1
    %s72 = scalar_select %p69, %s70, %s71
    %p75 = pneg %p69
    %p76 = scmp.eq.s32.totalorder %s8, 1
    %p77 = por %p75, %p76
    %p78 = scmp.ne.s32.totalorder %s70, %s73
    %p79 = scmp.eq.s32.totalorder %s8, 0
    %p80 = por %p78, %p79
    %p81 = scmp.ne.s32.totalorder %s70, %s73
    %p82 = scmp.eq.s32.totalorder %s13, 1
    %p83 = por %p81, %p82
    %p84 = scmp.ne.s32.totalorder %s73, %s74
    %p85 = scmp.eq.s32.totalorder %s13, 0
    %p86 = por %p84, %p85
    %p87 = scmp.ne.s32.totalorder %s73, %s74
    %p88 = scmp.eq.s32.totalorder %s14, 1
    %p89 = por %p87, %p88
    %p91 = scmp.ne.s32.totalorder %s74, %s90
    %p92 = scmp.eq.s32.totalorder %s14, 0
    %p93 = por %p91, %p92
    %p94 = scmp.le.s32.totalorder 1, %s8
    %p95 = scmp.lt.s32.totalorder %s8, 3
    %p96 = pnand %p94, %p95
    %p97 = pneg %p96
    // Predicated region
    $region9: #{dice_loss.1} parent=5 // pred_check
      _
    $region10: #{dice_loss.1} parent=5 // pred_check_branch
      %99 = sbr.rel (%p96) target = $region12
    $region11: #{dice_loss.1} parent=5 // pred_region
      %s100 = ssub.s32 %s8, 1
    $region12: #{dice_loss.1} parent=5 // pred_fallthru
      _
    %p101 = scmp.lt.s32.totalorder %s8, 2
    // Predicated region
    $region13: #{dice_loss.1} parent=5 // pred_check
      %p102 = pneg %p101
    $region14: #{dice_loss.1} parent=5 // pred_check_branch
      %104 = sbr.rel (%p102) target = $region16
    $region15: #{dice_loss.1} parent=5 // pred_region
      // Predicated region
      $region17: #{dice_loss.1} parent=15 // pred_check
        %p105 = pneg %p28
      $region18: #{dice_loss.1} parent=15 // pred_check_branch
        %107 = sbr.rel (%p105) target = $region20
      $region19: #{dice_loss.1} parent=15 // pred_region
        %p108 = scmp.lt.s32.totalorder %s8, 1
        %s109 = scalar_select %p108, %s8, 1
        %s110 = smul.addr %s109, 8
        %s111 = scalar_lea.vmem %s0, %s110
      $region20: #{dice_loss.1} parent=15 // pred_fallthru
        _
      // Predicated region
      $region21: #{dice_loss.1} parent=15 // pred_check
        %p112 = pneg %p54
      $region22: #{dice_loss.1} parent=15 // pred_check_branch
        %114 = sbr.rel (%p112) target = $region24
      $region23: #{dice_loss.1} parent=15 // pred_region
        %p115 = scmp.lt.s32.totalorder %s8, 1
        %s116 = scalar_select %p115, %s8, 1
        %s117 = smul.addr %s116, 8
        %s118 = scalar_lea.vmem %s1, %s117
      $region24: #{dice_loss.1} parent=15 // pred_fallthru
        _
    $region16: #{dice_loss.1} parent=5 // pred_fallthru
      _
    %p119 = scmp.le.s32.totalorder 1, %s8
    %p120 = scmp.lt.s32.totalorder %s8, 3
    %p121 = pnand %p119, %p120
    %p122 = pneg %p121
    // Predicated region
    $region25: #{dice_loss.1} parent=5 // pred_check
      _
    $region26: #{dice_loss.1} parent=5 // pred_check_branch
      %124 = sbr.rel (%p121) target = $region28
    $region27: #{dice_loss.1} parent=5 // pred_region
      %s125 = ssub.s32 %s8, 1
      %p126 = scmp.lt.s32.totalorder %s13, 1
      %s127 = scalar_select %p126, %s13, 1
      %s128 = smul.addr %s127, 8
      %s129 = scalar_lea.vmem %s0, %s128
      %p130 = pneg %p34
      %p131 = pneg %p31
      %p132 = scmp.lt.s32.totalorder %s13, 1
      %s133 = scalar_select %p132, %s13, 1
      %s134 = smul.addr %s133, 8
      %s135 = scalar_lea.vmem %s1, %s134
      %p136 = pneg %p60
      %p137 = pneg %p57
      %p138 = pneg %p86
      %p139 = pneg %p83
      %p140 = scmp.lt.s32.totalorder %s13, 1
      %s141 = scalar_select %p140, %s13, 1
      %s142 = smul.addr %s141, 2
      %s143 = smul.addr %s142, 8
      %s144 = scalar_lea.vmem %s2, %s143
      %p145 = scmp.lt.s32.totalorder %s13, 1
      %s146 = scalar_select %p145, %s13, 1
      %s147 = smul.addr %s146, 8
      %s148 = scalar_lea.vmem %s0, %s147
      %p149 = scmp.lt.s32.totalorder %s13, 1
      %s150 = scalar_select %p149, %s13, 1
      %s151 = smul.addr %s150, 8
      %s152 = scalar_lea.vmem %s1, %s151
      %p153 = scmp.lt.s32.totalorder %s13, 1
      %s154 = scalar_select %p153, %s13, 1
      %s155 = smul.addr %s154, 2
      %s156 = smul.addr %s155, 8
      %s157 = scalar_lea.vmem %s2, %s156
      %v158 = vld [vmem:[%s148] sm:$0xff]
      %v159 = vld [vmem:[%s152] sm:$0xff]
      %v160 = vmul.f32 %v158, %v159
      %v161 = vmul.f32 %v158, %v158
      %v162 = vmul.f32 %v159, %v159
      %v163 = vadd.f32 %v161, %v162
      %v164 = vadd.f32 %v160, 0.0
      %v165 = vadd.f32 %v164, 0.0
      %v166 = vadd.f32 %v163, 0.0
      %v167 = vadd.f32 %v166, 0.0
      %168 = vst [vmem:[%s157] sm:$0xff] %v165
      %s169 = scalar_lea.vmem %s157, 8
      %170 = vst [vmem:[%s169] sm:$0xff] %v167
      %p171 = scmp.lt.s32.totalorder %s13, 1
      %s172 = scalar_select %p171, %s13, 1
      %s173 = smul.addr %s172, 2
      %s174 = smul.addr %s173, 8
      %s175 = scalar_lea.vmem %s2, %s174
      // Predicated region
      $region29: #{dice_loss.1} parent=27 // pred_check
        %p176 = pneg %p83
      $region30: #{dice_loss.1} parent=27 // pred_check_branch
        %178 = sbr.rel (%p176) target = $region32
      $region31: #{dice_loss.1} parent=27 // pred_region
        _
      $region32: #{dice_loss.1} parent=27 // pred_fallthru
        _
    $region28: #{dice_loss.1} parent=5 // pred_fallthru
      _
    %p179 = scmp.le.s32.totalorder 2, %s8
    // Predicated region
    $region33: #{dice_loss.1} parent=5 // pred_check
      %p180 = pneg %p179
    $region34: #{dice_loss.1} parent=5 // pred_check_branch
      %182 = sbr.rel (%p180) target = $region36
    $region35: #{dice_loss.1} parent=5 // pred_region
      %s183 = ssub.s32 %s8, 2
      // Predicated region
      $region37: #{dice_loss.1} parent=35 // pred_check
        %p184 = pneg %p89
      $region38: #{dice_loss.1} parent=35 // pred_check_branch
        %186 = sbr.rel (%p184) target = $region40
      $region39: #{dice_loss.1} parent=35 // pred_region
        %p187 = scmp.lt.s32.totalorder %s14, 1
        %s188 = scalar_select %p187, %s14, 1
        %s189 = smul.addr %s188, 2
        %s190 = smul.addr %s189, 8
        %s191 = scalar_lea.vmem %s2, %s190
      $region40: #{dice_loss.1} parent=35 // pred_fallthru
        _
    $region36: #{dice_loss.1} parent=5 // pred_fallthru
      _
  $region6: #{dice_loss.1} parent=0 // loop_footer
    %s12 = sadd.s32 1, %s8
  $region7: #{dice_loss.1} parent=0 // loop_footer_branch
    %7 = sbr.rel target = $region3
  $region8: #{dice_loss.1} parent=0 // loop_exit
    _

</llo_original>
